<compile_context>
chip_gen: v7x
topology: tpu7x:2x2x1
jax: 0.10.0
libtpu: 0.0.40
codegen_flags: <defaults>
</compile_context>

<pallas_src>
import functools

import jax
import jax.numpy as jnp
from jax import lax
from jax.experimental import pallas as pl
from jax.experimental.pallas import tpu as pltpu


def _round_up(x, m):
    return (x + m - 1) // m * m


def _mix32(x):
    """lowbias32 integer mixer (Chris Wellons). All int32 ops (wrap on overflow)."""
    x = x ^ lax.shift_right_logical(x, jnp.int32(16))
    x = x * jnp.int32(0x7FEB352D)
    x = x ^ lax.shift_right_logical(x, jnp.int32(15))
    x = x * jnp.int32(-2073254261)        # 0x846CA68B as int32
    x = x ^ lax.shift_right_logical(x, jnp.int32(16))
    return x


def _one_hot_from_argmax(z, n_claster, num_classes):
    """one_hot(first argmax index along last dim), summed over n_claster groups.

    Since the full one-hot over T has exactly one 1, the group-sum equals
    one_hot(argmax mod num_classes) — computed directly on a lane-dense
    (rows, num_classes) iota (no (rows, T) one-hot, no unaligned lane slices).
    """
    rows, t = z.shape
    m = jnp.max(z, axis=-1, keepdims=True)
    idx = lax.broadcasted_iota(jnp.int32, z.shape, 1)
    first_max = jnp.min(jnp.where(z == m, idx, t), axis=-1, keepdims=True)  # (rows,1)
    if n_claster > 1:
        first_max = lax.rem(first_max, jnp.int32(num_classes))
    out_idx = lax.broadcasted_iota(jnp.int32, (rows, num_classes), 1)
    return (out_idx == first_max).astype(jnp.float32)


def _eval_kernel(x_ref, o_ref, *, n_claster, num_classes):
    # argmax(softmax(normalize(x)/tau)) == argmax(x): normalize is a per-row
    # positive scale and tau > 0, so skip normalize/softmax entirely.
    z = x_ref[...].astype(jnp.float32)
    o_ref[...] = _one_hot_from_argmax(z, n_claster, num_classes).astype(o_ref.dtype)


def _train_kernel(seed_ref, x_ref, o_ref, *, n_claster, num_classes):
    rows, t = x_ref.shape
    x = x_ref[...].astype(jnp.float32)

    # F.normalize(p=2, dim=-1, eps=1e-12): x / max(||x||, 1e-12) == x * rsqrt(max(||x||^2, 1e-24))
    norm_sq = jnp.sum(x * x, axis=-1, keepdims=True)
    xn = x * lax.rsqrt(jnp.maximum(norm_sq, jnp.float32(1e-24)))

    # Portable on-chip uniform noise: hash(absolute element index ^ seed) -> U[0,1).
    # (Noise stream is tied to absolute row/col indices, not to program_id/row_block.)
    row0 = pl.program_id(0) * rows
    r_idx = row0 + lax.broadcasted_iota(jnp.int32, (rows, t), 0)
    c_idx = lax.broadcasted_iota(jnp.int32, (rows, t), 1)
    ctr = r_idx * jnp.int32(t) + c_idx
    bits = _mix32(ctr ^ seed_ref[0])
    # torch noise: g = -(U/2 + 1e-7); z = (xn + g)/tau.  The constant -1e-7 and
    # the /tau are argmax-invariant, so only xn - U/2 matters.  Fold the /2 and
    # the 2^-23 scaling into one constant.
    u_half = (bits & jnp.int32(0x007FFFFF)).astype(jnp.float32) * jnp.float32(0.5 / (1 << 23))
    z = xn - u_half

    o_ref[...] = _one_hot_from_argmax(z, n_claster, num_classes).astype(o_ref.dtype)


def gumble_softmax_v3(logits, temp=1.0, training=False, key=None,
                      num_classes=None, n_claster=1, row_block=512):
    """Pallas implementation of GumbleSoftmaxV3.forward (forward value only).

    logits: (B, C, T) with T == n_claster * num_classes.
    Returns (B, C, num_classes) one-hot-per-group rows (same dtype as logits).
    """
    b, c, t = logits.shape
    if num_classes is None:
        num_classes = t // n_claster
    assert t == n_claster * num_classes, "last dim must equal n_claster * num_classes"

    # Flatten (B, C) into one row axis; grid over multiple-of-8 row chunks.
    # No jnp.pad: the ragged last block is handled by Pallas boundary handling
    # (dropped/recomputed rows are harmless for this per-row kernel).
    r = b * c
    x2 = logits.reshape(r, t)

    if r <= 8:
        rows = r                                    # single full-extent block
    else:
        half = _round_up(-(-r // 2), 8)             # >=2 blocks -> v7x megacore
        rows = max(8, min(_round_up(int(row_block), 8), half))
    n_blocks = pl.cdiv(r, rows)

    out_shape = jax.ShapeDtypeStruct((r, num_classes), logits.dtype)
    cparams = pltpu.CompilerParams(dimension_semantics=("parallel",))

    if training:
        if key is None:
            key = jax.random.PRNGKey(0)
        # Only a scalar seed crosses HBM; noise is generated in-kernel.
        seed = jax.random.randint(key, (1,), 0, jnp.iinfo(jnp.int32).max,
                                  dtype=jnp.int32)
        kernel = functools.partial(_train_kernel,
                                   n_claster=int(n_claster),
                                   num_classes=int(num_classes))
        out2 = pl.pallas_call(
            kernel,
            out_shape=out_shape,
            grid_spec=pltpu.PrefetchScalarGridSpec(
                num_scalar_prefetch=1,
                grid=(n_blocks,),
                in_specs=[pl.BlockSpec((rows, t), lambda i, seed_ref: (i, 0))],
                out_specs=pl.BlockSpec((rows, num_classes),
                                       lambda i, seed_ref: (i, 0)),
            ),
            compiler_params=cparams,
        )(seed, x2)
    else:
        kernel = functools.partial(_eval_kernel,
                                   n_claster=int(n_claster),
                                   num_classes=int(num_classes))
        out2 = pl.pallas_call(
            kernel,
            out_shape=out_shape,
            grid_spec=pltpu.PrefetchScalarGridSpec(
                num_scalar_prefetch=0,
                grid=(n_blocks,),
                in_specs=[pl.BlockSpec((rows, t), lambda i: (i, 0))],
                out_specs=pl.BlockSpec((rows, num_classes), lambda i: (i, 0)),
            ),
            compiler_params=cparams,
        )(x2)

    return out2.reshape(b, c, num_classes)


def _reference_eval(logits, temp=1.0, n_claster=1):
    """Pure-JAX reference of the eval (gumber=False, hard=True) path."""
    x = logits.astype(jnp.float32)
    norm = jnp.sqrt(jnp.sum(x * x, axis=-1, keepdims=True))
    xn = x / jnp.maximum(norm, 1e-12)
    z = xn / temp
    y_soft = jax.nn.softmax(z, axis=-1)
    y_hard = jax.nn.one_hot(jnp.argmax(y_soft, axis=-1), z.shape[-1],
                            dtype=jnp.float32)
    ret = y_hard - y_soft + y_soft
    b, c, t = logits.shape
    nc = t // n_claster
    return jnp.sum(ret.reshape(b, c, n_claster, nc), axis=2)


if __name__ == "__main__":
    key = jax.random.PRNGKey(0)
    B, C, NUM_CLASSES = 2, 4, 204   # module defaults: num_classes=204, n_claster=1
    x = jax.random.normal(key, (B, C, NUM_CLASSES), dtype=jnp.float32)

    # eval path (deterministic, no Gumbel noise) — check against pure-JAX reference
    out = jax.block_until_ready(gumble_softmax_v3(x, temp=1.0, training=False))
    ref = _reference_eval(x, temp=1.0)
    assert out.shape == (B, C, NUM_CLASSES), out.shape
    assert jnp.allclose(out, ref, atol=1e-5), "mismatch vs reference (eval)"
    assert jnp.allclose(jnp.sum(out, axis=-1), 1.0, atol=1e-5)

    # ragged row count (B*C = 15 -> blocks of 8, ragged last block, NO jnp.pad copy)
    x2 = jax.random.normal(jax.random.PRNGKey(2), (3, 5, NUM_CLASSES), dtype=jnp.float32)
    out2 = jax.block_until_ready(gumble_softmax_v3(x2, training=False, row_block=8))
    ref2 = _reference_eval(x2)
    assert out2.shape == (3, 5, NUM_CLASSES)
    assert jnp.allclose(out2, ref2, atol=1e-5), "mismatch vs reference (ragged eval)"

    # n_claster > 1 exercises the index-mod one-hot group sum
    x3 = jax.random.normal(jax.random.PRNGKey(3), (2, 3, 256), dtype=jnp.float32)
    out3 = jax.block_until_ready(gumble_softmax_v3(x3, training=False, n_claster=2))
    ref3 = _reference_eval(x3, n_claster=2)
    assert out3.shape == (2, 3, 128)
    assert jnp.allclose(out3, ref3, atol=1e-5), "mismatch vs reference (n_claster=2)"

    # training path (in-kernel hashed uniform noise before argmax) — rows must be one-hot
    out_tr = jax.block_until_ready(
        gumble_softmax_v3(x, temp=1.0, training=True, key=jax.random.PRNGKey(1)))
    assert out_tr.shape == (B, C, NUM_CLASSES)
    assert jnp.allclose(jnp.sum(out_tr, axis=-1), 1.0, atol=1e-5)
    assert bool(jnp.all((out_tr == 0.0) | (out_tr == 1.0)))

    print("KERNEL_OK")
</pallas_src>

<mosaic_0001>
module attributes {stable_mosaic.version = 11 : i64} {
  func.func @_eval_kernel(%arg0: i32, %arg1: memref<8x204xf32, #tpu.memory_space<vmem>>, %arg2: memref<8x204xf32, #tpu.memory_space<vmem>>) attributes {dimension_semantics = [#tpu.dimension_semantics<parallel>], iteration_bounds = array<i64: 1>, scalar_prefetch = 0 : i64, scratch_operands = 0 : i64, tpu.core_type = #tpu.core_type<tc>, window_params = [{transform_indices = @transform_0, window_bounds = array<i64: 8, 204>}, {transform_indices = @transform_1, window_bounds = array<i64: 8, 204>}]} {
    %c0 = arith.constant 0 : index
    %c0_0 = arith.constant 0 : index
    %0 = vector.load %arg1[%c0, %c0_0] : memref<8x204xf32, #tpu.memory_space<vmem>>, vector<8x204xf32>
    %cst = arith.constant dense<0xFF800000> : vector<8xf32>
    %1 = vector.multi_reduction <maximumf>, %0, %cst [1] : vector<8x204xf32> to vector<8xf32>
    %2 = vector.shape_cast %1 : vector<8xf32> to vector<8x1xf32>
    %3 = tpu.iota {dimensions = array<i32: 1>} : vector<8x204xi32>
    %4 = vector.broadcast %2 : vector<8x1xf32> to vector<8x204xf32>
    %5 = arith.cmpf oeq, %0, %4 : vector<8x204xf32>
    %c204_i32 = arith.constant 204 : i32
    %6 = vector.broadcast %c204_i32 : i32 to vector<8x204xi32>
    %7 = arith.select %5, %3, %6 : vector<8x204xi1>, vector<8x204xi32>
    %cst_1 = arith.constant dense<2147483647> : vector<8xi32>
    %8 = vector.multi_reduction <minsi>, %7, %cst_1 [1] : vector<8x204xi32> to vector<8xi32>
    %9 = vector.shape_cast %8 : vector<8xi32> to vector<8x1xi32>
    %10 = tpu.iota {dimensions = array<i32: 1>} : vector<8x204xi32>
    %11 = vector.broadcast %9 : vector<8x1xi32> to vector<8x204xi32>
    %12 = arith.cmpi eq, %10, %11 : vector<8x204xi32>
    %13 = arith.extui %12 : vector<8x204xi1> to vector<8x204xi32>
    %14 = arith.sitofp %13 : vector<8x204xi32> to vector<8x204xf32>
    %c0_2 = arith.constant 0 : index
    %c0_3 = arith.constant 0 : index
    %15 = vector.load %arg2[%c0_2, %c0_3] : memref<8x204xf32, #tpu.memory_space<vmem>>, vector<8x204xf32>
    tpu.vector_store %arg2[%c0_2, %c0_3], %14 {strides = array<i32>} : memref<8x204xf32, #tpu.memory_space<vmem>>, vector<8x204xf32>,
    return
  }
  func.func @transform_0(%arg0: i32) -> (i32, i32) {
    %c0_i32 = arith.constant 0 : i32
    %c0_i32_0 = arith.constant 0 : i32
    return %arg0, %c0_i32 : i32, i32
  }
  func.func @transform_1(%arg0: i32) -> (i32, i32) {
    %c0_i32 = arith.constant 0 : i32
    %c0_i32_0 = arith.constant 0 : i32
    return %arg0, %c0_i32 : i32, i32
  }
}

</mosaic_0001>

<llo_original>
// kernel: tpu_custom_call.1
$region0: #{tpu_custom_call.1}
  #allocation0 [shape = 'u32[]', space=smem, size = 0x4, offset = 0x4, fixed_abs, tag = 'smem constant byte address 0x4 - core index']
  #allocation1 [shape = 'u32[144,128]{1,0:T(1,128)}', space=vmem, size = 0x12000, scoped, tag = 'internal scratch']
  %s0 = inlined_call_operand.hbm [shape: f32[8,204], index: 0, kind: input, shape index: {}]
  %s1 = inlined_call_operand.hbm [shape: f32[8,204], index: 1, kind: output, shape index: {}]
  %s2 = sld [smem:[#allocation0]]
  $region18: #{tpu_custom_call.1} parent=0
    _
  %s4 = ssub.s32 1, %s2
  %s5 = scalar_select 0, %s4, %s2
  $region1: #{tpu_custom_call.1} parent=0
    #allocation2 [shape = 'u8[8192]{0}', space=vmem, size = 0x2000, scoped, tag = 'input window, operand 0, single buffered']
    #allocation3 [shape = 's32[1]{0}', space=sflag, size = 0x4, scoped, tag = 'scoped memory for tpu_custom_call.1']
    #allocation4 [shape = 's32[1]{0}', space=sflag, size = 0x4, scoped, tag = 'scoped memory for tpu_custom_call.1']
    #allocation5 [shape = 'u8[8192]{0}', space=vmem, size = 0x2000, scoped, tag = 'output window, operand 0, single buffered']
    %6 = vsyncpa [#allocation3], 0
    %7 = vsyncpa [#allocation4], 0
    // Predicated region
    $region2: #{tpu_custom_call.1} parent=1 // pred_check
      _
    $region3: #{tpu_custom_call.1} parent=1 // pred_check_branch
      %9 = sbr.rel (0) target = $region5
    $region4: #{tpu_custom_call.1} parent=1 // pred_region
      %s11 = ssub.s32 256, 256
      %12 = vsyncadd [#allocation3], %s11
      %s14 = sshll.u32 [#allocation2], 4
      %s15 = int_to_ptr.vmem [resolvable:$true] %s14
      %17 = dma.hbm_to_vmem [thread:$0]  %s0, 256, %s15, [#allocation3]
    $region5: #{tpu_custom_call.1} parent=1 // pred_fallthru
      _
    // Predicated region
    $region6: #{tpu_custom_call.1} parent=1 // pred_check
      _
    $region7: #{tpu_custom_call.1} parent=1 // pred_check_branch
      %19 = sbr.rel (0) target = $region9
    $region8: #{tpu_custom_call.1} parent=1 // pred_region
      %20 = dma.done [#allocation3], 256
    $region9: #{tpu_custom_call.1} parent=1 // pred_fallthru
      _
    %v21 = vld [vmem:[#allocation2] sm:$0xff]
    %v22 = vld [vmem:[#allocation2 + $0x8] sm:$0xff]
    %vm23 = vcmask 621568
    %v24 = vsel %vm23, %v22, -inf
    %v25 = vmax.f32 %v21, %v24
    %26 = vmax.xlane.f32.xlu0 %v25
    %v27 = vpop.xlane.xlu0 %26
    %v28 = vlaneseq
    %v29 = vand.u32 %v28, 127
    %v30 = vadd.s32 %v29, 128
    %vm31 = vcmp.eq.f32.partialorder %v21, %v27
    %vm32 = vcmp.eq.f32.partialorder %v22, %v27
    %v33 = vsel %vm31, %v29, 204
    %v34 = vsel %vm32, %v30, 204
    %v35 = vsel %vm23, %v34, 2147483647
    %vm36 = vcmp.lt.s32.totalorder %v33, %v35
    %v37 = vsel %vm36, %v33, %v35
    %v38 = vand.u32 %v37, 65535
    %v39 = vshra.s32 %v37, 16
    %v40 = vcvt.s32.f32 %v38
    %v41 = vcvt.s32.f32 %v39
    %42 = vmin.xlane.f32.xlu0 %v41
    %v43 = vpop.xlane.xlu0 %42
    %vm44 = vcmp.eq.f32.partialorder %v41, %v43
    %v45 = vsel %vm44, %v40, inf
    %46 = vmin.xlane.f32.xlu0 %v45
    %v47 = vpop.xlane.xlu0 %46
    %v48 = vcvt.f32.s32 %v47
    %v49 = vcvt.f32.s32 %v43
    %v50 = vshll.u32 %v49, 16
    %v51 = vadd.s32 %v50, %v48
    %vm52 = vcmp.eq.s32.totalorder %v29, %v51
    %vm53 = vcmp.eq.s32.totalorder %v30, %v51
    %v54 = vsel %vm52, 1, 0
    %v55 = vsel %vm53, 1, 0
    %v56 = vcvt.s32.f32 %v54
    %v57 = vcvt.s32.f32 %v55
    %58 = vst [vmem:[#allocation5] sm:$0xff] %v56
    %59 = vst.msk [vmem:[#allocation5 + $0x8] sm:$0xff] %vm23, %v57
    // Predicated region
    $region10: #{tpu_custom_call.1} parent=1 // pred_check
      _
    $region11: #{tpu_custom_call.1} parent=1 // pred_check_branch
      %61 = sbr.rel (0) target = $region13
    $region12: #{tpu_custom_call.1} parent=1 // pred_region
      %s63 = ssub.s32 256, 256
      %64 = vsyncadd [#allocation4], %s63
      %s66 = sshll.u32 [#allocation5], 4
      %s67 = int_to_ptr.vmem [resolvable:$true] %s66
      %69 = dma.vmem_to_hbm [thread:$0]  %s67, 256, %s1, [#allocation4]
    $region13: #{tpu_custom_call.1} parent=1 // pred_fallthru
      _
    // Predicated region
    $region14: #{tpu_custom_call.1} parent=1 // pred_check
      _
    $region15: #{tpu_custom_call.1} parent=1 // pred_check_branch
      %71 = sbr.rel (0) target = $region17
    $region16: #{tpu_custom_call.1} parent=1 // pred_region
      %72 = dma.done [#allocation4], 256
    $region17: #{tpu_custom_call.1} parent=1 // pred_fallthru
      _
    %73 = vsyncpa [#allocation3], 1
    %74 = vsyncpa [#allocation4], 1

</llo_original>
